<compile_context>
chip_gen: v5e
topology: v5e:2x2
jax: 0.10.0
libtpu: 0.0.40
codegen_flags: <defaults>
</compile_context>

<pallas_src>
import math

import jax
import jax.numpy as jnp
from jax.experimental import pallas as pl
from jax.experimental.pallas import tpu as pltpu


_VMEM_LIMIT = 32 * 1024 * 1024  # far above the ~5 MiB worst-case footprint; v7x-safe


# ----------------------------------------------------------------------------
# Pallas kernels
# ----------------------------------------------------------------------------

def _matmul_bias_relu_kernel(x_ref, w_ref, b_ref, o_ref):
    """One M-tile of o = relu(x @ w + b); x/w bf16, f32 accumulate, bf16 out."""
    o_ref[...] = jnp.maximum(
        jnp.dot(x_ref[...], w_ref[...], preferred_element_type=jnp.float32)
        + b_ref[...],
        0.0,
    ).astype(o_ref.dtype)


def _conv5_pool_kernel(ph_ref, w_ref, b_ref, o_ref):
    """Fused 3x3 / stride-2 / pad-1 conv + ReLU + global average pool, one batch.

    ph_ref: (4, Hq, Wq, C) bf16 -- the 2x2 spatial phases of the zero-padded
            feature map for this batch; phase p = rh*2 + rw holds padded pixel
            (2a + rh, 2c + rw) at position (a, c).  Every conv tap is therefore
            a unit-stride window of one phase (no strided loads, no im2col).
    w_ref : (9, C, N) bf16 conv weights, tap index t = kh*3 + kw, rows = c_in.
    b_ref : (1, N) f32 bias.
    o_ref : (1, 1, N) f32 -- spatially averaged relu(conv) for this batch.
    """
    _, Hq, Wq, C = ph_ref.shape
    Ho, Wo = Hq - 1, Wq - 1
    S = Ho * Wo
    N = w_ref.shape[2]

    acc = jnp.zeros((S, N), jnp.float32)
    for kh in range(3):
        qh, rh = divmod(kh, 2)
        for kw in range(3):
            qw, rw = divmod(kw, 2)
            ph = ph_ref[rh * 2 + rw]                                  # (Hq, Wq, C)
            patch = ph[qh:qh + Ho, qw:qw + Wo, :].reshape(S, C)       # unit-stride
            acc = acc + jnp.dot(patch, w_ref[kh * 3 + kw],
                                preferred_element_type=jnp.float32)
    act = jnp.maximum(acc + b_ref[...], 0.0)                          # (S, N) f32
    o_ref[...] = jnp.mean(act, axis=0, keepdims=True)[None, :, :]     # (1, 1, N)


def _heads_kernel(x_ref, w1_ref, b1_ref, w2_ref, b2_ref, o_ref):
    """Fused landmark head: out = relu(x @ W1 + b1) @ W2 + b2.

    Grid = (head, hidden_block).  W1/W2 stream as bf16 (halves the dominant
    HBM weight traffic); accumulation is f32.  The hidden dim is the reduction
    axis; partials accumulate directly into the resident (1, B, 4) output
    block (its index_map ignores the hidden axis), so no scratch is needed.
    """
    n = pl.program_id(1)

    @pl.when(n == 0)
    def _():
        o_ref[...] = jnp.broadcast_to(b2_ref[...], o_ref.shape)

    x_bf16 = x_ref[...].astype(jnp.bfloat16)
    hidden = jnp.maximum(
        jnp.dot(x_bf16, w1_ref[0], preferred_element_type=jnp.float32)
        + b1_ref[0],
        0.0,
    )                                                                 # (B, tn) f32
    # Dropout is identity in eval mode (see TODO at top).
    part = jnp.dot(hidden.astype(jnp.bfloat16), w2_ref[0],
                   preferred_element_type=jnp.float32)                # (B, 4)
    o_ref[...] += part[None, :, :]


# ----------------------------------------------------------------------------
# Pallas call wrappers
# ----------------------------------------------------------------------------

def conv_relu(patches_flat, w_mat, b_row, tm=2048):
    """patches_flat: (M, K) bf16, w_mat: (K, N) bf16, b_row: (1, N) f32 -> (M, N) bf16.

    Tiled over the patch-row dimension M ("parallel") so large images get
    double-buffered DMA/compute overlap; tm=2048 keeps per-step overhead low
    while bf16 tiles stay far under any generation's VMEM budget.
    """
    M, K = patches_flat.shape
    _, N = w_mat.shape
    tm = min(tm, M)  # full-dim block when M is small
    return pl.pallas_call(
        _matmul_bias_relu_kernel,
        out_shape=jax.ShapeDtypeStruct((M, N), jnp.bfloat16),
        grid=(pl.cdiv(M, tm),),
        in_specs=[
            pl.BlockSpec((tm, K), lambda i: (i, 0)),
            pl.BlockSpec((K, N), lambda i: (0, 0)),
            pl.BlockSpec((1, N), lambda i: (0, 0)),
        ],
        out_specs=pl.BlockSpec((tm, N), lambda i: (i, 0)),
        compiler_params=pltpu.CompilerParams(
            dimension_semantics=("parallel",),
            vmem_limit_bytes=_VMEM_LIMIT,
        ),
    )(patches_flat, w_mat, b_row)


def conv5_pool(phases, w_taps, b_row, B):
    """phases: (B*4, Hq, Wq, C) bf16, w_taps: (9, C, N) bf16, b_row: (1, N) f32
    -> (B, N) f32 global-average-pooled relu(conv5(feature)).

    Grid over batch ("parallel": the two v7x TensorCores split the batch);
    each step reads this batch's four phases once, does 9 accumulating tap
    matmuls, applies ReLU and reduces to one pooled row.  No im2col and no
    conv5 activation ever reach HBM.
    """
    _, Hq, Wq, C = phases.shape
    N = w_taps.shape[2]
    out = pl.pallas_call(
        _conv5_pool_kernel,
        out_shape=jax.ShapeDtypeStruct((B, 1, N), jnp.float32),
        grid=(B,),
        in_specs=[
            pl.BlockSpec((4, Hq, Wq, C), lambda b: (b, 0, 0, 0)),
            pl.BlockSpec((9, C, N), lambda b: (0, 0, 0)),
            pl.BlockSpec((1, N), lambda b: (0, 0)),
        ],
        out_specs=pl.BlockSpec((1, 1, N), lambda b: (b, 0, 0)),
        compiler_params=pltpu.CompilerParams(
            dimension_semantics=("parallel",),
            vmem_limit_bytes=_VMEM_LIMIT,
        ),
    )(phases, w_taps, b_row)
    return out.reshape(B, N)


def landmark_heads(pooled, w1, b1, w2, b2, tn=2048):
    """pooled: (B, in_ch) f32; w1: (4, in_ch, out_ch) bf16; b1: (4, 1, out_ch) f32;
    w2: (4, out_ch, 4) bf16; b2: (4, 1, 4) f32  ->  (4, B, 4) f32.

    tn=2048 (bf16) keeps the per-step W1 block at 2 MiB (4 MiB double-buffered)
    and gives each v7x TensorCore 4 pipelined steps (2 heads x 2 hidden blocks)
    so the first weight DMA is hidden behind compute/prefetch.
    """
    B, in_ch = pooled.shape
    nh, _, out_ch = w1.shape
    assert out_ch % tn == 0
    grid = (nh, out_ch // tn)
    return pl.pallas_call(
        _heads_kernel,
        out_shape=jax.ShapeDtypeStruct((nh, B, 4), jnp.float32),
        grid=grid,
        in_specs=[
            pl.BlockSpec((B, in_ch), lambda h, n: (0, 0)),
            pl.BlockSpec((1, in_ch, tn), lambda h, n: (h, 0, n)),
            pl.BlockSpec((1, 1, tn), lambda h, n: (h, 0, n)),
            pl.BlockSpec((1, tn, 4), lambda h, n: (h, n, 0)),
            pl.BlockSpec((1, 1, 4), lambda h, n: (h, 0, 0)),
        ],
        out_specs=pl.BlockSpec((1, B, 4), lambda h, n: (h, 0, 0)),
        compiler_params=pltpu.CompilerParams(
            # head axis parallel -> v7x's 2 TCs split the 4 heads 2/2;
            # hidden-dim axis is the reduction -> arbitrary.
            dimension_semantics=("parallel", "arbitrary"),
            vmem_limit_bytes=_VMEM_LIMIT,
        ),
    )(pooled, w1, b1, w2, b2)


# ----------------------------------------------------------------------------
# Plain-JAX glue (padding / reshapes / transposes only)
# ----------------------------------------------------------------------------

def im2col_nhwc(x_nhwc, k, stride, pad):
    """NHWC im2col -> (B, Ho*Wo, k*k*C), column order (kh, kw, c).

    Only used for the 3-channel input conv (27-wide columns), where the
    expansion is tiny; the 128-channel conv5 stage avoids im2col entirely.
    """
    B, H, W, C = x_nhwc.shape
    xp = jnp.pad(x_nhwc, ((0, 0), (pad, pad), (pad, pad), (0, 0)))
    Ho = (H + 2 * pad - k) // stride + 1
    Wo = (W + 2 * pad - k) // stride + 1
    slices = []
    for i in range(k):
        for j in range(k):
            slices.append(
                xp[:, i: i + stride * Ho: stride, j: j + stride * Wo: stride, :]
            )  # (B, Ho, Wo, C)
    p = jnp.stack(slices, axis=3)  # (B, Ho, Wo, k*k, C)
    p = p.reshape(B, Ho * Wo, k * k * C)
    return p, Ho, Wo


def phase_split_for_conv5(x_nhwc):
    """(B, H, W, C) -> (B*4, Hq, Wq, C) stride-2 phases of the pad-1 input.

    Phase p = rh*2 + rw holds padded pixel (2a + rh, 2c + rw) at (a, c), so a
    3x3 / stride-2 / pad-1 conv tap (kh, kw) reads phase (kh%2, kw%2) at the
    unit-stride window [kh//2 : kh//2 + Ho, kw//2 : kw//2 + Wo].
    Single cheap XLA relayout (~1x the feature bytes, vs 9x for im2col).
    """
    B, H, W, C = x_nhwc.shape
    Ho = (H - 1) // 2 + 1          # = (H + 2*1 - 3)//2 + 1
    Wo = (W - 1) // 2 + 1
    Hq, Wq = Ho + 1, Wo + 1
    xp = jnp.pad(x_nhwc, ((0, 0), (1, 2 * Hq - H - 1), (1, 2 * Wq - W - 1), (0, 0)))
    xp = xp.reshape(B, Hq, 2, Wq, 2, C)
    xp = jnp.transpose(xp, (0, 2, 4, 1, 3, 5))      # (B, 2, 2, Hq, Wq, C)
    return xp.reshape(B * 4, Hq, Wq, C), Ho, Wo


def conv_weight_to_matrix_hwc(w_oihw):
    """(C_out, C_in, kh, kw) -> (kh*kw*C_in, C_out), rows ordered (kh, kw, c_in)
    to match the NHWC im2col column order above."""
    c_out, c_in, kh, kw = w_oihw.shape
    return jnp.transpose(w_oihw, (2, 3, 1, 0)).reshape(kh * kw * c_in, c_out)


def conv_weight_to_taps(w_oihw):
    """(C_out, C_in, 3, 3) -> (9, C_in, C_out), tap index t = kh*3 + kw."""
    c_out, c_in, kh, kw = w_oihw.shape
    return jnp.transpose(w_oihw, (2, 3, 1, 0)).reshape(kh * kw, c_in, c_out)


def init_params(key, in_ch=512, out_ch=4096, feat_ch=128):
    ks = jax.random.split(key, 4)
    # Conv weights: normal(0, sqrt(2 / (k*k*C_out))), bias zero (as in
    # LandmarkNet._initialize_weights for nn.Conv2d).
    w_feat = jax.random.normal(ks[0], (feat_ch, 3, 3, 3), jnp.float32) * math.sqrt(
        2.0 / (3 * 3 * feat_ch)
    )
    w_c5 = jax.random.normal(ks[1], (in_ch, feat_ch, 3, 3), jnp.float32) * math.sqrt(
        2.0 / (3 * 3 * in_ch)
    )
    # Linear weights: normal(0, 0.01), bias zero.  Stored (in, out).  All
    # matmul operands are bf16 (MXU-native); biases / accumulation stay f32.
    w1 = jax.random.normal(ks[2], (4, in_ch, out_ch), jnp.float32) * 0.01
    w2 = jax.random.normal(ks[3], (4, out_ch, 4), jnp.float32) * 0.01
    return {
        "w_feat": conv_weight_to_matrix_hwc(w_feat).astype(jnp.bfloat16),  # (27, feat_ch)
        "b_feat": jnp.zeros((1, feat_ch), jnp.float32),
        "w_c5": conv_weight_to_taps(w_c5).astype(jnp.bfloat16),            # (9, feat_ch, in_ch)
        "b_c5": jnp.zeros((1, in_ch), jnp.float32),
        "w1": w1.astype(jnp.bfloat16),
        "b1": jnp.zeros((4, 1, out_ch), jnp.float32),
        "w2": w2.astype(jnp.bfloat16),
        "b2": jnp.zeros((4, 1, 4), jnp.float32),
    }


def landmarknet_forward(x, params):
    """x: (B, 3, H, W) NCHW float32 -> (collar, sleeve, waistline, hem, feature)."""
    B = x.shape[0]
    x_nhwc = jnp.transpose(x, (0, 2, 3, 1)).astype(jnp.bfloat16)  # NHWC, bf16

    # --- features stage (stand-in for resnet.children()[:6]) ---------------
    p_feat, Ho, Wo = im2col_nhwc(x_nhwc, k=3, stride=2, pad=1)    # (B, Ho*Wo, 27) bf16
    feat_flat = conv_relu(
        p_feat.reshape(B * Ho * Wo, -1), params["w_feat"], params["b_feat"]
    )                                                             # (B*Ho*Wo, feat_ch) bf16
    feature_nhwc = feat_flat.reshape(B, Ho, Wo, -1)

    # --- conv5 stage + global average pool (children()[6:9]) ---------------
    # No HBM im2col: phase-split once, then 9 unit-stride tap matmuls + ReLU
    # + mean pool fused in a single per-batch Pallas kernel.
    phases, Ho5, Wo5 = phase_split_for_conv5(feature_nhwc)        # (B*4, Hq, Wq, fc) bf16
    pooled = conv5_pool(phases, params["w_c5"], params["b_c5"], B)  # (B, in_ch) f32

    # --- four landmark heads (the module's own Linear layers) --------------
    heads = landmark_heads(
        pooled, params["w1"], params["b1"], params["w2"], params["b2"]
    )                                                             # (4, B, 4) f32
    collar, sleeve, waistline, hem = heads[0], heads[1], heads[2], heads[3]

    # NCHW / f32 feature map for the API output (off the hot path).
    feature = jnp.transpose(feature_nhwc, (0, 3, 1, 2)).astype(jnp.float32)
    return collar, sleeve, waistline, hem, feature


if __name__ == "__main__":
    key = jax.random.PRNGKey(0)
    kx, kp = jax.random.split(key)

    # Small, module-consistent shapes: batch=2, RGB 32x32 input,
    # resnet18-style in_ch=512, head hidden out_ch=4096.
    x = jax.random.normal(kx, (2, 3, 32, 32), jnp.float32)
    params = init_params(kp, in_ch=512, out_ch=4096, feat_ch=128)

    outs = landmarknet_forward(x, params)
    outs = jax.block_until_ready(outs)

    collar, sleeve, waistline, hem, feature = outs
    assert collar.shape == (2, 4)
    assert sleeve.shape == (2, 4)
    assert waistline.shape == (2, 4)
    assert hem.shape == (2, 4)
    assert feature.shape == (2, 128, 16, 16)
    assert all(bool(jnp.all(jnp.isfinite(o))) for o in outs)

    print("KERNEL_OK")
</pallas_src>

<mosaic_0001>
module attributes {stable_mosaic.version = 11 : i64} {
  func.func @_matmul_bias_relu_kernel(%arg0: i32, %arg1: memref<512x27xbf16, #tpu.memory_space<vmem>>, %arg2: memref<27x128xbf16, #tpu.memory_space<vmem>>, %arg3: memref<1x128xf32, #tpu.memory_space<vmem>>, %arg4: memref<512x128xbf16, #tpu.memory_space<vmem>>) attributes {dimension_semantics = [#tpu.dimension_semantics<parallel>], iteration_bounds = array<i64: 1>, scalar_prefetch = 0 : i64, scratch_operands = 0 : i64, tpu.core_type = #tpu.core_type<tc>, window_params = [{transform_indices = @transform_0, window_bounds = array<i64: 512, 27>}, {pipeline_mode = #tpu.pipeline_mode<synchronous>, transform_indices = @transform_1, window_bounds = array<i64: 27, 128>}, {pipeline_mode = #tpu.pipeline_mode<synchronous>, transform_indices = @transform_2, window_bounds = array<i64: 1, 128>}, {transform_indices = @transform_3, window_bounds = array<i64: 512, 128>}]} {
    %c0 = arith.constant 0 : index
    %c0_0 = arith.constant 0 : index
    %0 = vector.load %arg1[%c0, %c0_0] : memref<512x27xbf16, #tpu.memory_space<vmem>>, vector<512x27xbf16>
    %c0_1 = arith.constant 0 : index
    %c0_2 = arith.constant 0 : index
    %1 = vector.load %arg2[%c0_1, %c0_2] : memref<27x128xbf16, #tpu.memory_space<vmem>>, vector<27x128xbf16>
    %cst = arith.constant dense<0.000000e+00> : vector<512x128xf32>
    %2 = tpu.matmul %0, %1, %cst {dimension_numbers = #tpu.dot_dimension_numbers<[1], [0], [0], [1], [0, 0, 1, 1], [], []>} : vector<512x27xbf16>, vector<27x128xbf16>, vector<512x128xf32> -> vector<512x128xf32>
    %c0_3 = arith.constant 0 : index
    %c0_4 = arith.constant 0 : index
    %3 = vector.load %arg3[%c0_3, %c0_4] : memref<1x128xf32, #tpu.memory_space<vmem>>, vector<1x128xf32>
    %4 = vector.broadcast %3 : vector<1x128xf32> to vector<512x128xf32>
    %5 = arith.addf %2, %4 : vector<512x128xf32>
    %cst_5 = arith.constant 0.000000e+00 : f32
    %6 = vector.broadcast %cst_5 : f32 to vector<512x128xf32>
    %7 = arith.maximumf %5, %6 : vector<512x128xf32>
    %8 = arith.truncf %7 : vector<512x128xf32> to vector<512x128xbf16>
    %c0_6 = arith.constant 0 : index
    %c0_7 = arith.constant 0 : index
    %9 = vector.load %arg4[%c0_6, %c0_7] : memref<512x128xbf16, #tpu.memory_space<vmem>>, vector<512x128xbf16>
    tpu.vector_store %arg4[%c0_6, %c0_7], %8 {strides = array<i32>} : memref<512x128xbf16, #tpu.memory_space<vmem>>, vector<512x128xbf16>,
    return
  }
  func.func @transform_0(%arg0: i32) -> (i32, i32) {
    %c0_i32 = arith.constant 0 : i32
    %c0_i32_0 = arith.constant 0 : i32
    return %arg0, %c0_i32 : i32, i32
  }
  func.func @transform_1(%arg0: i32) -> (i32, i32) {
    %c0_i32 = arith.constant 0 : i32
    %c0_i32_0 = arith.constant 0 : i32
    %c0_i32_1 = arith.constant 0 : i32
    return %c0_i32, %c0_i32_0 : i32, i32
  }
  func.func @transform_2(%arg0: i32) -> (i32, i32) {
    %c0_i32 = arith.constant 0 : i32
    %c0_i32_0 = arith.constant 0 : i32
    %c0_i32_1 = arith.constant 0 : i32
    return %c0_i32, %c0_i32_0 : i32, i32
  }
  func.func @transform_3(%arg0: i32) -> (i32, i32) {
    %c0_i32 = arith.constant 0 : i32
    %c0_i32_0 = arith.constant 0 : i32
    return %arg0, %c0_i32 : i32, i32
  }
}

</mosaic_0001>

<llo_original>
// kernel: tpu_custom_call.1
$region0: #{tpu_custom_call.1}
  #allocation0 [shape = 'u32[]', space=smem, size = 0x4, offset = 0x4, fixed_abs, tag = 'smem constant byte address 0x4 - core index']
  #allocation1 [shape = 'u32[72,128]{1,0:T(1,128)}', space=vmem, size = 0x9000, scoped, tag = 'internal scratch']
  %s0 = inlined_call_operand.vmem [shape: bf16[512,27], index: 0, kind: input, shape index: {}]
  %s1 = inlined_call_operand.vmem [shape: bf16[27,128], index: 1, kind: input, shape index: {}]
  %s2 = inlined_call_operand.vmem [shape: f32[1,128], index: 2, kind: input, shape index: {}]
  %s3 = inlined_call_operand.hbm [shape: bf16[512,128], index: 3, kind: output, shape index: {}]
  %s4 = sld [smem:[#allocation0]]
  $region22: #{tpu_custom_call.1} parent=0
    _
  %s6 = ssub.s32 1, %s4
  %s7 = scalar_select 0, %s6, %s4
  $region1: #{tpu_custom_call.1} parent=0
    #allocation2 [shape = 'u8[131072]{0}', space=vmem, size = 0x20000, scoped, tag = 'output window, operand 0, single buffered']
    #allocation3 [shape = 's32[1]{0}', space=sflag, size = 0x4, scoped, tag = 'scoped memory for tpu_custom_call.1']
    %8 = vsyncpa [#allocation3], 0
    // Predicated region
    $region2: #{tpu_custom_call.1} parent=1 // pred_check
      _
    $region3: #{tpu_custom_call.1} parent=1 // pred_check_branch
      %10 = sbr.rel (0) target = $region5
    $region4: #{tpu_custom_call.1} parent=1 // pred_region
      _
    $region5: #{tpu_custom_call.1} parent=1 // pred_fallthru
      _
    // Predicated region
    $region6: #{tpu_custom_call.1} parent=1 // pred_check
      _
    $region7: #{tpu_custom_call.1} parent=1 // pred_check_branch
      %12 = sbr.rel (0) target = $region9
    $region8: #{tpu_custom_call.1} parent=1 // pred_region
      _
    $region9: #{tpu_custom_call.1} parent=1 // pred_fallthru
      _
    // Predicated region
    $region10: #{tpu_custom_call.1} parent=1 // pred_check
      _
    $region11: #{tpu_custom_call.1} parent=1 // pred_check_branch
      %14 = sbr.rel (0) target = $region13
    $region12: #{tpu_custom_call.1} parent=1 // pred_region
      _
    $region13: #{tpu_custom_call.1} parent=1 // pred_fallthru
      _
    %v16 = vld [vmem:[%s0] sm:$0xf]
    %v17 = vld [vmem:[%s0 + $0x4] sm:$0xf]
    %v18 = vld [vmem:[%s0 + $0x8] sm:$0xf]
    %v19 = vld [vmem:[%s0 + $0xc] sm:$0xf]
    %v20 = vld [vmem:[%s0 + $0x10] sm:$0xf]
    %v21 = vld [vmem:[%s0 + $0x14] sm:$0xf]
    %v22 = vld [vmem:[%s0 + $0x18] sm:$0xf]
    %v23 = vld [vmem:[%s0 + $0x1c] sm:$0xf]
    %v24 = vld [vmem:[%s0 + $0x20] sm:$0xf]
    %v25 = vld [vmem:[%s0 + $0x24] sm:$0xf]
    %v26 = vld [vmem:[%s0 + $0x28] sm:$0xf]
    %v27 = vld [vmem:[%s0 + $0x2c] sm:$0xf]
    %v28 = vld [vmem:[%s0 + $0x30] sm:$0xf]
    %v29 = vld [vmem:[%s0 + $0x34] sm:$0xf]
    %v30 = vld [vmem:[%s0 + $0x38] sm:$0xf]
    %v31 = vld [vmem:[%s0 + $0x3c] sm:$0xf]
    %v32 = vld [vmem:[%s0 + $0x40] sm:$0xf]
    %v33 = vld [vmem:[%s0 + $0x44] sm:$0xf]
    %v34 = vld [vmem:[%s0 + $0x48] sm:$0xf]
    %v35 = vld [vmem:[%s0 + $0x4c] sm:$0xf]
    %v36 = vld [vmem:[%s0 + $0x50] sm:$0xf]
    %v37 = vld [vmem:[%s0 + $0x54] sm:$0xf]
    %v38 = vld [vmem:[%s0 + $0x58] sm:$0xf]
    %v39 = vld [vmem:[%s0 + $0x5c] sm:$0xf]
    %v40 = vld [vmem:[%s0 + $0x60] sm:$0xf]
    %v41 = vld [vmem:[%s0 + $0x64] sm:$0xf]
    %v42 = vld [vmem:[%s0 + $0x68] sm:$0xf]
    %v43 = vld [vmem:[%s0 + $0x6c] sm:$0xf]
    %v44 = vld [vmem:[%s0 + $0x70] sm:$0xf]
    %v45 = vld [vmem:[%s0 + $0x74] sm:$0xf]
    %v46 = vld [vmem:[%s0 + $0x78] sm:$0xf]
    %v47 = vld [vmem:[%s0 + $0x7c] sm:$0xf]
    %v48 = vld [vmem:[%s0 + $0x80] sm:$0xf]
    %v49 = vld [vmem:[%s0 + $0x84] sm:$0xf]
    %v50 = vld [vmem:[%s0 + $0x88] sm:$0xf]
    %v51 = vld [vmem:[%s0 + $0x8c] sm:$0xf]
    %v52 = vld [vmem:[%s0 + $0x90] sm:$0xf]
    %v53 = vld [vmem:[%s0 + $0x94] sm:$0xf]
    %v54 = vld [vmem:[%s0 + $0x98] sm:$0xf]
    %v55 = vld [vmem:[%s0 + $0x9c] sm:$0xf]
    %v56 = vld [vmem:[%s0 + $0xa0] sm:$0xf]
    %v57 = vld [vmem:[%s0 + $0xa4] sm:$0xf]
    %v58 = vld [vmem:[%s0 + $0xa8] sm:$0xf]
    %v59 = vld [vmem:[%s0 + $0xac] sm:$0xf]
    %v60 = vld [vmem:[%s0 + $0xb0] sm:$0xf]
    %v61 = vld [vmem:[%s0 + $0xb4] sm:$0xf]
    %v62 = vld [vmem:[%s0 + $0xb8] sm:$0xf]
    %v63 = vld [vmem:[%s0 + $0xbc] sm:$0xf]
    %v64 = vld [vmem:[%s0 + $0xc0] sm:$0xf]
    %v65 = vld [vmem:[%s0 + $0xc4] sm:$0xf]
    %v66 = vld [vmem:[%s0 + $0xc8] sm:$0xf]
    %v67 = vld [vmem:[%s0 + $0xcc] sm:$0xf]
    %v68 = vld [vmem:[%s0 + $0xd0] sm:$0xf]
    %v69 = vld [vmem:[%s0 + $0xd4] sm:$0xf]
    %v70 = vld [vmem:[%s0 + $0xd8] sm:$0xf]
    %v71 = vld [vmem:[%s0 + $0xdc] sm:$0xf]
    %v72 = vld [vmem:[%s0 + $0xe0] sm:$0xf]
    %v73 = vld [vmem:[%s0 + $0xe4] sm:$0xf]
    %v74 = vld [vmem:[%s0 + $0xe8] sm:$0xf]
    %v75 = vld [vmem:[%s0 + $0xec] sm:$0xf]
    %v76 = vld [vmem:[%s0 + $0xf0] sm:$0xf]
    %v77 = vld [vmem:[%s0 + $0xf4] sm:$0xf]
    %v78 = vld [vmem:[%s0 + $0xf8] sm:$0xf]
    %v79 = vld [vmem:[%s0 + $0xfc] sm:$0xf]
    %v80 = vld [vmem:[%s1] sm:$0xf]
    %v81 = vld [vmem:[%s1 + $0x4] sm:$0xf]
    %v82 = vld [vmem:[%s1 + $0x8] sm:$0xf]
    %v83 = vld [vmem:[%s1 + $0xc] sm:$0x3]
    %v84 = vld [vmem:[%s2] sm:$0x1]
    %v86 = vperm.slane %v84, 0
    %v152 = vunpack.c.l.b16 %v16
    %v153 = vunpack.c.l.b16 %v17
    %v154 = vunpack.c.l.b16 %v18
    %v155 = vunpack.c.l.b16 %v19
    %v156 = vunpack.c.l.b16 %v20
    %v157 = vunpack.c.l.b16 %v21
    %v158 = vunpack.c.l.b16 %v22
    %v159 = vunpack.c.l.b16 %v23
    %v160 = vunpack.c.l.b16 %v24
    %v161 = vunpack.c.l.b16 %v25
    %v162 = vunpack.c.l.b16 %v26
    %v163 = vunpack.c.l.b16 %v27
    %v164 = vunpack.c.l.b16 %v28
    %v165 = vunpack.c.l.b16 %v29
    %v166 = vunpack.c.l.b16 %v30
    %v167 = vunpack.c.l.b16 %v31
    %v168 = vunpack.c.l.b16 %v32
    %v169 = vunpack.c.l.b16 %v33
    %v170 = vunpack.c.l.b16 %v34
    %v171 = vunpack.c.l.b16 %v35
    %v172 = vunpack.c.l.b16 %v36
    %v173 = vunpack.c.l.b16 %v37
    %v174 = vunpack.c.l.b16 %v38
    %v175 = vunpack.c.l.b16 %v39
    %v176 = vunpack.c.l.b16 %v40
    %v177 = vunpack.c.l.b16 %v41
    %v178 = vunpack.c.l.b16 %v42
    %v179 = vunpack.c.l.b16 %v43
    %v180 = vunpack.c.l.b16 %v44
    %v181 = vunpack.c.l.b16 %v45
    %v182 = vunpack.c.l.b16 %v46
    %v183 = vunpack.c.l.b16 %v47
    %v184 = vunpack.c.l.b16 %v48
    %v185 = vunpack.c.l.b16 %v49
    %v186 = vunpack.c.l.b16 %v50
    %v187 = vunpack.c.l.b16 %v51
    %v188 = vunpack.c.l.b16 %v52
    %v189 = vunpack.c.l.b16 %v53
    %v190 = vunpack.c.l.b16 %v54
    %v191 = vunpack.c.l.b16 %v55
    %v192 = vunpack.c.l.b16 %v56
    %v193 = vunpack.c.l.b16 %v57
    %v194 = vunpack.c.l.b16 %v58
    %v195 = vunpack.c.l.b16 %v59
    %v196 = vunpack.c.l.b16 %v60
    %v197 = vunpack.c.l.b16 %v61
    %v198 = vunpack.c.l.b16 %v62
    %v199 = vunpack.c.l.b16 %v63
    %v200 = vunpack.c.l.b16 %v64
    %v201 = vunpack.c.l.b16 %v65
    %v202 = vunpack.c.l.b16 %v66
    %v203 = vunpack.c.l.b16 %v67
    %v204 = vunpack.c.l.b16 %v68
    %v205 = vunpack.c.l.b16 %v69
    %v206 = vunpack.c.l.b16 %v70
    %v207 = vunpack.c.l.b16 %v71
    %v208 = vunpack.c.l.b16 %v72
    %v209 = vunpack.c.l.b16 %v73
    %v210 = vunpack.c.l.b16 %v74
    %v211 = vunpack.c.l.b16 %v75
    %v212 = vunpack.c.l.b16 %v76
    %v213 = vunpack.c.l.b16 %v77
    %v214 = vunpack.c.l.b16 %v78
    %v215 = vunpack.c.l.b16 %v79
    %v216 = vpack.c.b16 %v153, %v152
    %v217 = vpack.c.b16 %v155, %v154
    %v218 = vpack.c.b16 %v157, %v156
    %v219 = vpack.c.b16 %v159, %v158
    %v220 = vpack.c.b16 %v161, %v160
    %v221 = vpack.c.b16 %v163, %v162
    %v222 = vpack.c.b16 %v165, %v164
    %v223 = vpack.c.b16 %v167, %v166
    %v224 = vpack.c.b16 %v169, %v168
    %v225 = vpack.c.b16 %v171, %v170
    %v226 = vpack.c.b16 %v173, %v172
    %v227 = vpack.c.b16 %v175, %v174
    %v228 = vpack.c.b16 %v177, %v176
    %v229 = vpack.c.b16 %v179, %v178
    %v230 = vpack.c.b16 %v181, %v180
    %v231 = vpack.c.b16 %v183, %v182
    %v232 = vpack.c.b16 %v185, %v184
    %v233 = vpack.c.b16 %v187, %v186
    %v234 = vpack.c.b16 %v189, %v188
    %v235 = vpack.c.b16 %v191, %v190
    %v236 = vpack.c.b16 %v193, %v192
    %v237 = vpack.c.b16 %v195, %v194
    %v238 = vpack.c.b16 %v197, %v196
    %v239 = vpack.c.b16 %v199, %v198
    %v240 = vpack.c.b16 %v201, %v200
    %v241 = vpack.c.b16 %v203, %v202
    %v242 = vpack.c.b16 %v205, %v204
    %v243 = vpack.c.b16 %v207, %v206
    %v244 = vpack.c.b16 %v209, %v208
    %v245 = vpack.c.b16 %v211, %v210
    %v246 = vpack.c.b16 %v213, %v212
    %v247 = vpack.c.b16 %v215, %v214
    %v252 = vunpack.c.l.b16 %v80
    %v253 = vunpack.c.l.b16 %v81
    %v254 = vunpack.c.l.b16 %v82
    %v255 = vunpack.c.l.b16 %v83
    %v256 = vpack.c.b16 %v253, %v252
    %v257 = vpack.c.b16 %v255, %v254
    %vm259 = vcmask 220160
    %v261 = vsel %vm259, %v216, 0
    %v264 = vsel %vm259, %v217, 0
    %v267 = vsel %vm259, %v218, 0
    %v270 = vsel %vm259, %v219, 0
    %v273 = vsel %vm259, %v220, 0
    %v276 = vsel %vm259, %v221, 0
    %v279 = vsel %vm259, %v222, 0
    %v282 = vsel %vm259, %v223, 0
    %v285 = vsel %vm259, %v224, 0
    %v288 = vsel %vm259, %v225, 0
    %v291 = vsel %vm259, %v226, 0
    %v294 = vsel %vm259, %v227, 0
    %v297 = vsel %vm259, %v228, 0
    %v300 = vsel %vm259, %v229, 0
    %v303 = vsel %vm259, %v230, 0
    %v306 = vsel %vm259, %v231, 0
    %v309 = vsel %vm259, %v232, 0
    %v312 = vsel %vm259, %v233, 0
    %v315 = vsel %vm259, %v234, 0
    %v318 = vsel %vm259, %v235, 0
    %v321 = vsel %vm259, %v236, 0
    %v324 = vsel %vm259, %v237, 0
    %v327 = vsel %vm259, %v238, 0
    %v330 = vsel %vm259, %v239, 0
    %v333 = vsel %vm259, %v240, 0
    %v336 = vsel %vm259, %v241, 0
    %v339 = vsel %vm259, %v242, 0
    %v342 = vsel %vm259, %v243, 0
    %v345 = vsel %vm259, %v244, 0
    %v348 = vsel %vm259, %v245, 0
    %v351 = vsel %vm259, %v246, 0
    %v354 = vsel %vm259, %v247, 0
    %vm356 = vcmask 1044480
    %vm357 = vcmask 1045504
    %v358 = vsel %vm356, 4294967295, 65535
    %v359 = vsel %vm357, %v358, 0
    %v361 = vand.u32 %v257, %v359
    %363 = vmatpush.bf16.msra.mxu0 0
    %364 = vmatpush.bf16.msra.mxu0 0
    %365 = vmatpush.bf16.msra.mxu0 0
    %366 = vmatpush.bf16.msra.mxu0 0
    %367 = vmatpush.bf16.msra.mxu0 0
    %368 = vmatpush.bf16.msra.mxu0 0
    %369 = vmatpush.bf16.msra.mxu0 %v361
    %370 = vmatpush.bf16.msra.mxu0 %v256
    %371 = vmatmul.bf16.gmra.mxu0 %v261
    %v372 = vpop.f32.mrf.mxu0
    %v373 = vadd.f32 %v86, %v372
    %v374 = vpop.f32.mrf.mxu0
    %v375 = vadd.f32 %v86, %v374
    %376 = vmatmul.bf16.gmra.mxu0 %v264
    %v377 = vpop.f32.mrf.mxu0
    %v378 = vadd.f32 %v86, %v377
    %v379 = vpop.f32.mrf.mxu0
    %v380 = vadd.f32 %v86, %v379
    %381 = vmatmul.bf16.gmra.mxu0 %v267
    %v382 = vpop.f32.mrf.mxu0
    %v383 = vadd.f32 %v86, %v382
    %v384 = vpop.f32.mrf.mxu0
    %v385 = vadd.f32 %v86, %v384
    %386 = vmatmul.bf16.gmra.mxu0 %v270
    %v387 = vpop.f32.mrf.mxu0
    %v388 = vadd.f32 %v86, %v387
    %v389 = vpop.f32.mrf.mxu0
    %v390 = vadd.f32 %v86, %v389
    %391 = vmatmul.bf16.gmra.mxu0 %v273
    %v392 = vpop.f32.mrf.mxu0
    %v393 = vadd.f32 %v86, %v392
    %v394 = vpop.f32.mrf.mxu0
    %v395 = vadd.f32 %v86, %v394
    %396 = vmatmul.bf16.gmra.mxu0 %v276
    %v397 = vpop.f32.mrf.mxu0
    %v398 = vadd.f32 %v86, %v397
    %v399 = vpop.f32.mrf.mxu0
    %v400 = vadd.f32 %v86, %v399
    %401 = vmatmul.bf16.gmra.mxu0 %v279
    %v402 = vpop.f32.mrf.mxu0
    %v403 = vadd.f32 %v86, %v402
    %v404 = vpop.f32.mrf.mxu0
    %v405 = vadd.f32 %v86, %v404
    %406 = vmatmul.bf16.gmra.mxu0 %v282
    %v407 = vpop.f32.mrf.mxu0
    %v408 = vadd.f32 %v86, %v407
    %v409 = vpop.f32.mrf.mxu0
    %v410 = vadd.f32 %v86, %v409
    %411 = vmatmul.bf16.gmra.mxu0 %v285
    %v412 = vpop.f32.mrf.mxu0
    %v413 = vadd.f32 %v86, %v412
    %v414 = vpop.f32.mrf.mxu0
    %v415 = vadd.f32 %v86, %v414
    %416 = vmatmul.bf16.gmra.mxu0 %v288
    %v417 = vpop.f32.mrf.mxu0
    %v418 = vadd.f32 %v86, %v417
    %v419 = vpop.f32.mrf.mxu0
    %v420 = vadd.f32 %v86, %v419
    %421 = vmatmul.bf16.gmra.mxu0 %v291
    %v422 = vpop.f32.mrf.mxu0
    %v423 = vadd.f32 %v86, %v422
    %v424 = vpop.f32.mrf.mxu0
    %v425 = vadd.f32 %v86, %v424
    %426 = vmatmul.bf16.gmra.mxu0 %v294
    %v427 = vpop.f32.mrf.mxu0
    %v428 = vadd.f32 %v86, %v427
    %v429 = vpop.f32.mrf.mxu0
    %v430 = vadd.f32 %v86, %v429
    %431 = vmatmul.bf16.gmra.mxu0 %v297
    %v432 = vpop.f32.mrf.mxu0
    %v433 = vadd.f32 %v86, %v432
    %v434 = vpop.f32.mrf.mxu0
    %v435 = vadd.f32 %v86, %v434
    %436 = vmatmul.bf16.gmra.mxu0 %v300
    %v437 = vpop.f32.mrf.mxu0
    %v438 = vadd.f32 %v86, %v437
    %v439 = vpop.f32.mrf.mxu0
    %v440 = vadd.f32 %v86, %v439
    %441 = vmatmul.bf16.gmra.mxu0 %v303
    %v442 = vpop.f32.mrf.mxu0
    %v443 = vadd.f32 %v86, %v442
    %v444 = vpop.f32.mrf.mxu0
    %v445 = vadd.f32 %v86, %v444
    %446 = vmatmul.bf16.gmra.mxu0 %v306
    %v447 = vpop.f32.mrf.mxu0
    %v448 = vadd.f32 %v86, %v447
    %v449 = vpop.f32.mrf.mxu0
    %v450 = vadd.f32 %v86, %v449
    %451 = vmatmul.bf16.gmra.mxu0 %v309
    %v452 = vpop.f32.mrf.mxu0
    %v453 = vadd.f32 %v86, %v452
    %v454 = vpop.f32.mrf.mxu0
    %v455 = vadd.f32 %v86, %v454
    %456 = vmatmul.bf16.gmra.mxu0 %v312
    %v457 = vpop.f32.mrf.mxu0
    %v458 = vadd.f32 %v86, %v457
    %v459 = vpop.f32.mrf.mxu0
    %v460 = vadd.f32 %v86, %v459
    %461 = vmatmul.bf16.gmra.mxu0 %v315
    %v462 = vpop.f32.mrf.mxu0
    %v463 = vadd.f32 %v86, %v462
    %v464 = vpop.f32.mrf.mxu0
    %v465 = vadd.f32 %v86, %v464
    %466 = vmatmul.bf16.gmra.mxu0 %v318
    %v467 = vpop.f32.mrf.mxu0
    %v468 = vadd.f32 %v86, %v467
    %v469 = vpop.f32.mrf.mxu0
    %v470 = vadd.f32 %v86, %v469
    %471 = vmatmul.bf16.gmra.mxu0 %v321
    %v472 = vpop.f32.mrf.mxu0
    %v473 = vadd.f32 %v86, %v472
    %v474 = vpop.f32.mrf.mxu0
    %v475 = vadd.f32 %v86, %v474
    %476 = vmatmul.bf16.gmra.mxu0 %v324
    %v477 = vpop.f32.mrf.mxu0
    %v478 = vadd.f32 %v86, %v477
    %v479 = vpop.f32.mrf.mxu0
    %v480 = vadd.f32 %v86, %v479
    %481 = vmatmul.bf16.gmra.mxu0 %v327
    %v482 = vpop.f32.mrf.mxu0
    %v483 = vadd.f32 %v86, %v482
    %v484 = vpop.f32.mrf.mxu0
    %v485 = vadd.f32 %v86, %v484
    %486 = vmatmul.bf16.gmra.mxu0 %v330
    %v487 = vpop.f32.mrf.mxu0
    %v488 = vadd.f32 %v86, %v487
    %v489 = vpop.f32.mrf.mxu0
    %v490 = vadd.f32 %v86, %v489
    %491 = vmatmul.bf16.gmra.mxu0 %v333
    %v492 = vpop.f32.mrf.mxu0
    %v493 = vadd.f32 %v86, %v492
    %v494 = vpop.f32.mrf.mxu0
    %v495 = vadd.f32 %v86, %v494
    %496 = vmatmul.bf16.gmra.mxu0 %v336
    %v497 = vpop.f32.mrf.mxu0
    %v498 = vadd.f32 %v86, %v497
    %v499 = vpop.f32.mrf.mxu0
    %v500 = vadd.f32 %v86, %v499
    %501 = vmatmul.bf16.gmra.mxu0 %v339
    %v502 = vpop.f32.mrf.mxu0
    %v503 = vadd.f32 %v86, %v502
    %v504 = vpop.f32.mrf.mxu0
    %v505 = vadd.f32 %v86, %v504
    %506 = vmatmul.bf16.gmra.mxu0 %v342
    %v507 = vpop.f32.mrf.mxu0
    %v508 = vadd.f32 %v86, %v507
    %v509 = vpop.f32.mrf.mxu0
    %v510 = vadd.f32 %v86, %v509
    %511 = vmatmul.bf16.gmra.mxu0 %v345
    %v512 = vpop.f32.mrf.mxu0
    %v513 = vadd.f32 %v86, %v512
    %v514 = vpop.f32.mrf.mxu0
    %v515 = vadd.f32 %v86, %v514
    %516 = vmatmul.bf16.gmra.mxu0 %v348
    %v517 = vpop.f32.mrf.mxu0
    %v518 = vadd.f32 %v86, %v517
    %v519 = vpop.f32.mrf.mxu0
    %v520 = vadd.f32 %v86, %v519
    %521 = vmatmul.bf16.gmra.mxu0 %v351
    %v522 = vpop.f32.mrf.mxu0
    %v523 = vadd.f32 %v86, %v522
    %v524 = vpop.f32.mrf.mxu0
    %v525 = vadd.f32 %v86, %v524
    %526 = vmatmul.bf16.gmra.mxu0 %v354
    %v527 = vpop.f32.mrf.mxu0
    %v528 = vadd.f32 %v86, %v527
    %v529 = vpop.f32.mrf.mxu0
    %v530 = vadd.f32 %v86, %v529
    %531 = vdwg.mxu0
    %v532 = vmax.f32 %v373, 0.0
    %v533 = vmax.f32 %v375, 0.0
    %v534 = vmax.f32 %v378, 0.0
    %v535 = vmax.f32 %v380, 0.0
    %v536 = vmax.f32 %v383, 0.0
    %v537 = vmax.f32 %v385, 0.0
    %v538 = vmax.f32 %v388, 0.0
    %v539 = vmax.f32 %v390, 0.0
    %v540 = vmax.f32 %v393, 0.0
    %v541 = vmax.f32 %v395, 0.0
    %v542 = vmax.f32 %v398, 0.0
    %v543 = vmax.f32 %v400, 0.0
    %v544 = vmax.f32 %v403, 0.0
    %v545 = vmax.f32 %v405, 0.0
    %v546 = vmax.f32 %v408, 0.0
    %v547 = vmax.f32 %v410, 0.0
    %v548 = vmax.f32 %v413, 0.0
    %v549 = vmax.f32 %v415, 0.0
    %v550 = vmax.f32 %v418, 0.0
    %v551 = vmax.f32 %v420, 0.0
    %v552 = vmax.f32 %v423, 0.0
    %v553 = vmax.f32 %v425, 0.0
    %v554 = vmax.f32 %v428, 0.0
    %v555 = vmax.f32 %v430, 0.0
    %v556 = vmax.f32 %v433, 0.0
    %v557 = vmax.f32 %v435, 0.0
    %v558 = vmax.f32 %v438, 0.0
    %v559 = vmax.f32 %v440, 0.0
    %v560 = vmax.f32 %v443, 0.0
    %v561 = vmax.f32 %v445, 0.0
    %v562 = vmax.f32 %v448, 0.0
    %v563 = vmax.f32 %v450, 0.0
    %v564 = vmax.f32 %v453, 0.0
    %v565 = vmax.f32 %v455, 0.0
    %v566 = vmax.f32 %v458, 0.0
    %v567 = vmax.f32 %v460, 0.0
    %v568 = vmax.f32 %v463, 0.0
    %v569 = vmax.f32 %v465, 0.0
    %v570 = vmax.f32 %v468, 0.0
    %v571 = vmax.f32 %v470, 0.0
    %v572 = vmax.f32 %v473, 0.0
    %v573 = vmax.f32 %v475, 0.0
    %v574 = vmax.f32 %v478, 0.0
    %v575 = vmax.f32 %v480, 0.0
    %v576 = vmax.f32 %v483, 0.0
    %v577 = vmax.f32 %v485, 0.0
    %v578 = vmax.f32 %v488, 0.0
    %v579 = vmax.f32 %v490, 0.0
    %v580 = vmax.f32 %v493, 0.0
    %v581 = vmax.f32 %v495, 0.0
    %v582 = vmax.f32 %v498, 0.0
    %v583 = vmax.f32 %v500, 0.0
    %v584 = vmax.f32 %v503, 0.0
    %v585 = vmax.f32 %v505, 0.0
    %v586 = vmax.f32 %v508, 0.0
    %v587 = vmax.f32 %v510, 0.0
    %v588 = vmax.f32 %v513, 0.0
    %v589 = vmax.f32 %v515, 0.0
    %v590 = vmax.f32 %v518, 0.0
    %v591 = vmax.f32 %v520, 0.0
    %v592 = vmax.f32 %v523, 0.0
    %v593 = vmax.f32 %v525, 0.0
    %v594 = vmax.f32 %v528, 0.0
    %v595 = vmax.f32 %v530, 0.0
    %v596 = vpack.c.bf16 %v532, %v532
    %v597 = vpack.c.bf16 %v533, %v533
    %v598 = vpack.c.bf16 %v534, %v534
    %v599 = vpack.c.bf16 %v535, %v535
    %v600 = vpack.c.bf16 %v536, %v536
    %v601 = vpack.c.bf16 %v537, %v537
    %v602 = vpack.c.bf16 %v538, %v538
    %v603 = vpack.c.bf16 %v539, %v539
    %v604 = vpack.c.bf16 %v540, %v540
    %v605 = vpack.c.bf16 %v541, %v541
    %v606 = vpack.c.bf16 %v542, %v542
    %v607 = vpack.c.bf16 %v543, %v543
    %v608 = vpack.c.bf16 %v544, %v544
    %v609 = vpack.c.bf16 %v545, %v545
    %v610 = vpack.c.bf16 %v546, %v546
    %v611 = vpack.c.bf16 %v547, %v547
    %v612 = vpack.c.bf16 %v548, %v548
    %v613 = vpack.c.bf16 %v549, %v549
    %v614 = vpack.c.bf16 %v550, %v550
    %v615 = vpack.c.bf16 %v551, %v551
    %v616 = vpack.c.bf16 %v552, %v552
    %v617 = vpack.c.bf16 %v553, %v553
    %v618 = vpack.c.bf16 %v554, %v554
    %v619 = vpack.c.bf16 %v555, %v555
    %v620 = vpack.c.bf16 %v556, %v556
    %v621 = vpack.c.bf16 %v557, %v557
    %v622 = vpack.c.bf16 %v558, %v558
    %v623 = vpack.c.bf16 %v559, %v559
    %v624 = vpack.c.bf16 %v560, %v560
    %v625 = vpack.c.bf16 %v561, %v561
    %v626 = vpack.c.bf16 %v562, %v562
    %v627 = vpack.c.bf16 %v563, %v563
    %v628 = vpack.c.bf16 %v564, %v564
    %v629 = vpack.c.bf16 %v565, %v565
    %v630 = vpack.c.bf16 %v566, %v566
    %v631 = vpack.c.bf16 %v567, %v567
    %v632 = vpack.c.bf16 %v568, %v568
    %v633 = vpack.c.bf16 %v569, %v569
    %v634 = vpack.c.bf16 %v570, %v570
    %v635 = vpack.c.bf16 %v571, %v571
    %v636 = vpack.c.bf16 %v572, %v572
    %v637 = vpack.c.bf16 %v573, %v573
    %v638 = vpack.c.bf16 %v574, %v574
    %v639 = vpack.c.bf16 %v575, %v575
    %v640 = vpack.c.bf16 %v576, %v576
    %v641 = vpack.c.bf16 %v577, %v577
    %v642 = vpack.c.bf16 %v578, %v578
    %v643 = vpack.c.bf16 %v579, %v579
    %v644 = vpack.c.bf16 %v580, %v580
    %v645 = vpack.c.bf16 %v581, %v581
    %v646 = vpack.c.bf16 %v582, %v582
    %v647 = vpack.c.bf16 %v583, %v583
    %v648 = vpack.c.bf16 %v584, %v584
    %v649 = vpack.c.bf16 %v585, %v585
    %v650 = vpack.c.bf16 %v586, %v586
    %v651 = vpack.c.bf16 %v587, %v587
    %v652 = vpack.c.bf16 %v588, %v588
    %v653 = vpack.c.bf16 %v589, %v589
    %v654 = vpack.c.bf16 %v590, %v590
    %v655 = vpack.c.bf16 %v591, %v591
    %v656 = vpack.c.bf16 %v592, %v592
    %v657 = vpack.c.bf16 %v593, %v593
    %v658 = vpack.c.bf16 %v594, %v594
    %v659 = vpack.c.bf16 %v595, %v595
    %660 = vst [vmem:[#allocation2] sm:$0xf] %v596
    %661 = vst [vmem:[#allocation2 + $0x4] sm:$0xf] %v597
    %662 = vst [vmem:[#allocation2 + $0x8] sm:$0xf] %v598
    %663 = vst [vmem:[#allocation2 + $0xc] sm:$0xf] %v599
    %664 = vst [vmem:[#allocation2 + $0x10] sm:$0xf] %v600
    %665 = vst [vmem:[#allocation2 + $0x14] sm:$0xf] %v601
    %666 = vst [vmem:[#allocation2 + $0x18] sm:$0xf] %v602
    %667 = vst [vmem:[#allocation2 + $0x1c] sm:$0xf] %v603
    %668 = vst [vmem:[#allocation2 + $0x20] sm:$0xf] %v604
    %669 = vst [vmem:[#allocation2 + $0x24] sm:$0xf] %v605
    %670 = vst [vmem:[#allocation2 + $0x28] sm:$0xf] %v606
    %671 = vst [vmem:[#allocation2 + $0x2c] sm:$0xf] %v607
    %672 = vst [vmem:[#allocation2 + $0x30] sm:$0xf] %v608
    %673 = vst [vmem:[#allocation2 + $0x34] sm:$0xf] %v609
    %674 = vst [vmem:[#allocation2 + $0x38] sm:$0xf] %v610
    %675 = vst [vmem:[#allocation2 + $0x3c] sm:$0xf] %v611
    %676 = vst [vmem:[#allocation2 + $0x40] sm:$0xf] %v612
    %677 = vst [vmem:[#allocation2 + $0x44] sm:$0xf] %v613
    %678 = vst [vmem:[#allocation2 + $0x48] sm:$0xf] %v614
    %679 = vst [vmem:[#allocation2 + $0x4c] sm:$0xf] %v615
    %680 = vst [vmem:[#allocation2 + $0x50] sm:$0xf] %v616
    %681 = vst [vmem:[#allocation2 + $0x54] sm:$0xf] %v617
    %682 = vst [vmem:[#allocation2 + $0x58] sm:$0xf] %v618
    %683 = vst [vmem:[#allocation2 + $0x5c] sm:$0xf] %v619
    %684 = vst [vmem:[#allocation2 + $0x60] sm:$0xf] %v620
    %685 = vst [vmem:[#allocation2 + $0x64] sm:$0xf] %v621
    %686 = vst [vmem:[#allocation2 + $0x68] sm:$0xf] %v622
    %687 = vst [vmem:[#allocation2 + $0x6c] sm:$0xf] %v623
    %688 = vst [vmem:[#allocation2 + $0x70] sm:$0xf] %v624
    %689 = vst [vmem:[#allocation2 + $0x74] sm:$0xf] %v625
    %690 = vst [vmem:[#allocation2 + $0x78] sm:$0xf] %v626
    %691 = vst [vmem:[#allocation2 + $0x7c] sm:$0xf] %v627
    %692 = vst [vmem:[#allocation2 + $0x80] sm:$0xf] %v628
    %693 = vst [vmem:[#allocation2 + $0x84] sm:$0xf] %v629
    %694 = vst [vmem:[#allocation2 + $0x88] sm:$0xf] %v630
    %695 = vst [vmem:[#allocation2 + $0x8c] sm:$0xf] %v631
    %696 = vst [vmem:[#allocation2 + $0x90] sm:$0xf] %v632
    %697 = vst [vmem:[#allocation2 + $0x94] sm:$0xf] %v633
    %698 = vst [vmem:[#allocation2 + $0x98] sm:$0xf] %v634
    %699 = vst [vmem:[#allocation2 + $0x9c] sm:$0xf] %v635
    %700 = vst [vmem:[#allocation2 + $0xa0] sm:$0xf] %v636
    %701 = vst [vmem:[#allocation2 + $0xa4] sm:$0xf] %v637
    %702 = vst [vmem:[#allocation2 + $0xa8] sm:$0xf] %v638
    %703 = vst [vmem:[#allocation2 + $0xac] sm:$0xf] %v639
    %704 = vst [vmem:[#allocation2 + $0xb0] sm:$0xf] %v640
    %705 = vst [vmem:[#allocation2 + $0xb4] sm:$0xf] %v641
    %706 = vst [vmem:[#allocation2 + $0xb8] sm:$0xf] %v642
    %707 = vst [vmem:[#allocation2 + $0xbc] sm:$0xf] %v643
    %708 = vst [vmem:[#allocation2 + $0xc0] sm:$0xf] %v644
    %709 = vst [vmem:[#allocation2 + $0xc4] sm:$0xf] %v645
    %710 = vst [vmem:[#allocation2 + $0xc8] sm:$0xf] %v646
    %711 = vst [vmem:[#allocation2 + $0xcc] sm:$0xf] %v647
    %712 = vst [vmem:[#allocation2 + $0xd0] sm:$0xf] %v648
    %713 = vst [vmem:[#allocation2 + $0xd4] sm:$0xf] %v649
    %714 = vst [vmem:[#allocation2 + $0xd8] sm:$0xf] %v650
    %715 = vst [vmem:[#allocation2 + $0xdc] sm:$0xf] %v651
    %716 = vst [vmem:[#allocation2 + $0xe0] sm:$0xf] %v652
    %717 = vst [vmem:[#allocation2 + $0xe4] sm:$0xf] %v653
    %718 = vst [vmem:[#allocation2 + $0xe8] sm:$0xf] %v654
    %719 = vst [vmem:[#allocation2 + $0xec] sm:$0xf] %v655
    %720 = vst [vmem:[#allocation2 + $0xf0] sm:$0xf] %v656
    %721 = vst [vmem:[#allocation2 + $0xf4] sm:$0xf] %v657
    %722 = vst [vmem:[#allocation2 + $0xf8] sm:$0xf] %v658
    %723 = vst [vmem:[#allocation2 + $0xfc] sm:$0xf] %v659
    // Predicated region
    $region14: #{tpu_custom_call.1} parent=1 // pred_check
      _
    $region15: #{tpu_custom_call.1} parent=1 // pred_check_branch
      %725 = sbr.rel (0) target = $region17
    $region16: #{tpu_custom_call.1} parent=1 // pred_region
      %727 = vsyncadd [#allocation3], 0
      %s728 = sshll.u32 [#allocation2], 4
      %s729 = int_to_ptr.vmem [resolvable:$true] %s728
      %s730 = sshll.u32 %s3, 4
      %s731 = int_to_ptr.hbm [resolvable:$true] %s730
      %736 = dma.vmem_to_hbm [thread:$0]  %s729, 4096, %s731, [#allocation3], 64, 64, 4
    $region17: #{tpu_custom_call.1} parent=1 // pred_fallthru
      _
    // Predicated region
    $region18: #{tpu_custom_call.1} parent=1 // pred_check
      _
    $region19: #{tpu_custom_call.1} parent=1 // pred_check_branch
      %738 = sbr.rel (0) target = $region21
    $region20: #{tpu_custom_call.1} parent=1 // pred_region
      %740 = dma.done [#allocation3], 4096
    $region21: #{tpu_custom_call.1} parent=1 // pred_fallthru
      _
    %741 = vsyncpa [#allocation3], 1

</llo_original>
